<compile_context>
chip_gen: v5e
topology: v5e:2x2
jax: 0.10.0
libtpu: 0.0.40
codegen_flags: <defaults>
</compile_context>

<pallas_src>
import jax
import jax.numpy as jnp
from jax.experimental import pallas as pl
from jax.experimental.pallas import tpu as pltpu


HIDDEN_DIM = 128
OUTPUT_DIM = 1
_MAX_TILE = 2048


def _round_up(x, m):
    return ((x + m - 1) // m) * m


def _action_value_kernel(s_ref, a_ref, ws_ref, wa_ref, c_ref, bo_ref, out_ref):
    # s_ref : (tb, S)      state tile
    # a_ref : (tb, A)      action tile
    # ws_ref: (S, 128)     state projection weight
    # wa_ref: (A, 128)     action projection weight
    # c_ref : (2, 128)     row 0 = bs + ba, row 1 = wo (output weight row)
    # bo_ref: (1, 1)       output bias, SMEM scalar
    # out_ref: (1, tb)     lane-dense Q-values
    h = jnp.dot(s_ref[...], ws_ref[...], preferred_element_type=jnp.float32)
    h = h + jnp.dot(a_ref[...], wa_ref[...], preferred_element_type=jnp.float32)
    h = jax.nn.sigmoid(h + c_ref[0:1, :])                 # EUP transcendental
    # Output layer (128 -> 1) as wo · h^T on the idle MXU; result (1, tb) is
    # already lane-dense so the store is full-width and unmasked.
    q = jax.lax.dot_general(
        c_ref[1:2, :], h,
        dimension_numbers=(((1,), (1,)), ((), ())),
        preferred_element_type=jnp.float32)               # (1, tb)
    out_ref[...] = (q + bo_ref[0, 0]).astype(out_ref.dtype)


def _pick_tile(B, batch_tile):
    if batch_tile is not None:
        tb = min(_round_up(batch_tile, 128), _round_up(B, 128))
    elif B < 256:
        tb = B                                            # single grid step
    else:
        # >= 2 grid steps so v7x's two TensorCores both get work; tile must be
        # a multiple of 128 for the lane-dense output blocks.
        tb = min(_MAX_TILE, _round_up(pl.cdiv(B, 2), 128))
    if tb >= B:
        tb = B                                            # full-array block
    return tb


def action_value_forward(state, action, params, *, batch_tile=None,
                         use_pallas=None):
    """Forward pass of ActionValueNetwork.

    state : (B, state_dim) float32
    action: (B, action_dim) float32
    params: dict with ws (S,128), bs (1,128), wa (A,128), ba (1,128),
            wo (128,1), bo (1,1)
    returns (B, 1) float32
    """
    B, S = state.shape
    Ba, A = action.shape
    assert B == Ba, "state/action batch mismatch"

    if use_pallas is None:
        use_pallas = B > 16
    if not use_pallas:
        # Tiny batch: pallas_call dispatch dominates; let XLA fuse it.
        return reference_forward(state, action, params)

    state = state.astype(jnp.float32)
    action = action.astype(jnp.float32)

    # Tiny constants: fuse (bs+ba) and the output-weight row into one block.
    consts = jnp.concatenate(
        [params["bs"] + params["ba"],
         params["wo"].reshape(1, HIDDEN_DIM)], axis=0)     # (2, 128)
    bo = params["bo"].reshape(1, 1).astype(jnp.float32)    # (1, 1) -> SMEM

    tb = _pick_tile(B, batch_tile)
    n_steps = pl.cdiv(B, tb)
    Bp = n_steps * tb   # output padded to a whole number of blocks (no input pad)

    full = lambda i: (0, 0)   # constants: same block every grid step

    out_flat = pl.pallas_call(
        _action_value_kernel,
        out_shape=jax.ShapeDtypeStruct((1, Bp), jnp.float32),
        grid_spec=pltpu.PrefetchScalarGridSpec(
            num_scalar_prefetch=0,
            grid=(n_steps,),
            in_specs=[
                pl.BlockSpec((tb, S), lambda i: (i, 0)),            # state tile
                pl.BlockSpec((tb, A), lambda i: (i, 0)),            # action tile
                pl.BlockSpec((S, HIDDEN_DIM), full),                # Ws
                pl.BlockSpec((A, HIDDEN_DIM), full),                # Wa
                pl.BlockSpec((2, HIDDEN_DIM), full),                # bias + wo row
                pl.BlockSpec(memory_space=pltpu.MemorySpace.SMEM),  # bo scalar
            ],
            out_specs=pl.BlockSpec((1, tb), lambda i: (0, i)),      # lane-dense
        ),
        compiler_params=pltpu.CompilerParams(
            dimension_semantics=("parallel",)),
    )(state, action, params["ws"], params["wa"], consts, bo)

    # Overhanging rows of the last block are garbage; slice them off.
    return out_flat[0, :B].reshape(B, 1)


def init_params(key, state_dim, action_dim):
    """Deterministic synthetic parameters (Xavier-normal-like), (in,out) layout."""
    k1, k2, k3, k4, k5, k6 = jax.random.split(key, 6)

    def xavier(k, fan_in, fan_out):
        std = jnp.sqrt(2.0 / (fan_in + fan_out))
        return std * jax.random.normal(k, (fan_in, fan_out), dtype=jnp.float32)

    return {
        "ws": xavier(k1, state_dim, HIDDEN_DIM),
        "bs": 0.01 * jax.random.normal(k2, (1, HIDDEN_DIM), dtype=jnp.float32),
        "wa": xavier(k3, action_dim, HIDDEN_DIM),
        "ba": 0.01 * jax.random.normal(k4, (1, HIDDEN_DIM), dtype=jnp.float32),
        "wo": xavier(k5, HIDDEN_DIM, OUTPUT_DIM),
        "bo": 0.01 * jax.random.normal(k6, (1, OUTPUT_DIM), dtype=jnp.float32),
    }


def reference_forward(state, action, p):
    x_s = state @ p["ws"] + p["bs"]
    x_a = action @ p["wa"] + p["ba"]
    x = jax.nn.sigmoid(x_s + x_a)
    return x @ p["wo"] + p["bo"]


if __name__ == "__main__":
    key = jax.random.PRNGKey(0)
    k_s, k_a, k_p, k_s2, k_a2 = jax.random.split(key, 5)

    state_dim = 8
    action_dim = 4
    params = init_params(k_p, state_dim, action_dim)

    TOL = dict(atol=2e-3, rtol=2e-3)   # float32 + MXU default precision vs f64 spec

    # ---- small batch, forced through the Pallas kernel (single grid step) --
    batch = 8
    state = jax.random.normal(k_s, (batch, state_dim), dtype=jnp.float32)
    action = jax.random.normal(k_a, (batch, action_dim), dtype=jnp.float32)

    out = jax.block_until_ready(
        action_value_forward(state, action, params, use_pallas=True))
    ref = reference_forward(state, action, params)
    assert out.shape == (batch, 1)
    assert jnp.allclose(out, ref, **TOL), "mismatch vs reference (small batch)"

    # ---- larger ragged batch: multi-step grid + overhanging last block -----
    batch2 = 1000
    state2 = jax.random.normal(k_s2, (batch2, state_dim), dtype=jnp.float32)
    action2 = jax.random.normal(k_a2, (batch2, action_dim), dtype=jnp.float32)

    out2 = jax.block_until_ready(action_value_forward(state2, action2, params))
    ref2 = reference_forward(state2, action2, params)
    assert out2.shape == (batch2, 1)
    assert jnp.allclose(out2, ref2, **TOL), "mismatch vs reference (large batch)"

    # ---- tiny-batch XLA fallback path (B <= 16) ----------------------------
    out3 = jax.block_until_ready(action_value_forward(state, action, params))
    assert jnp.allclose(out3, ref, atol=1e-5), "mismatch vs reference (fallback)"

    print("KERNEL_OK")
</pallas_src>

<mosaic_0001>
module attributes {stable_mosaic.version = 11 : i64} {
  func.func @_action_value_kernel(%arg0: i32, %arg1: memref<8x8xf32, #tpu.memory_space<vmem>>, %arg2: memref<8x4xf32, #tpu.memory_space<vmem>>, %arg3: memref<8x128xf32, #tpu.memory_space<vmem>>, %arg4: memref<4x128xf32, #tpu.memory_space<vmem>>, %arg5: memref<2x128xf32, #tpu.memory_space<vmem>>, %arg6: memref<1x1xf32, #tpu.memory_space<smem>>, %arg7: memref<1x8xf32, #tpu.memory_space<vmem>>) attributes {dimension_semantics = [#tpu.dimension_semantics<parallel>], iteration_bounds = array<i64: 1>, scalar_prefetch = 0 : i64, scratch_operands = 0 : i64, tpu.core_type = #tpu.core_type<tc>, window_params = [{transform_indices = @transform_0, window_bounds = array<i64: 8, 8>}, {transform_indices = @transform_1, window_bounds = array<i64: 8, 4>}, {pipeline_mode = #tpu.pipeline_mode<synchronous>, transform_indices = @transform_2, window_bounds = array<i64: 8, 128>}, {pipeline_mode = #tpu.pipeline_mode<synchronous>, transform_indices = @transform_3, window_bounds = array<i64: 4, 128>}, {pipeline_mode = #tpu.pipeline_mode<synchronous>, transform_indices = @transform_4, window_bounds = array<i64: 2, 128>}, {transform_indices = @transform_5, window_bounds = array<i64: 1, 1>}, {transform_indices = @transform_6, window_bounds = array<i64: 1, 8>}]} {
    %c0 = arith.constant 0 : index
    %c0_0 = arith.constant 0 : index
    %0 = vector.load %arg1[%c0, %c0_0] : memref<8x8xf32, #tpu.memory_space<vmem>>, vector<8x8xf32>
    %c0_1 = arith.constant 0 : index
    %c0_2 = arith.constant 0 : index
    %1 = vector.load %arg3[%c0_1, %c0_2] : memref<8x128xf32, #tpu.memory_space<vmem>>, vector<8x128xf32>
    %cst = arith.constant dense<0.000000e+00> : vector<8x128xf32>
    %2 = tpu.matmul %0, %1, %cst {dimension_numbers = #tpu.dot_dimension_numbers<[1], [0], [0], [1], [0, 0, 1, 1], [], []>} : vector<8x8xf32>, vector<8x128xf32>, vector<8x128xf32> -> vector<8x128xf32>
    %c0_3 = arith.constant 0 : index
    %c0_4 = arith.constant 0 : index
    %3 = vector.load %arg2[%c0_3, %c0_4] : memref<8x4xf32, #tpu.memory_space<vmem>>, vector<8x4xf32>
    %c0_5 = arith.constant 0 : index
    %c0_6 = arith.constant 0 : index
    %4 = vector.load %arg4[%c0_5, %c0_6] : memref<4x128xf32, #tpu.memory_space<vmem>>, vector<4x128xf32>
    %cst_7 = arith.constant dense<0.000000e+00> : vector<8x128xf32>
    %5 = tpu.matmul %3, %4, %cst_7 {dimension_numbers = #tpu.dot_dimension_numbers<[1], [0], [0], [1], [0, 0, 1, 1], [], []>} : vector<8x4xf32>, vector<4x128xf32>, vector<8x128xf32> -> vector<8x128xf32>
    %6 = arith.addf %2, %5 : vector<8x128xf32>
    %c0_8 = arith.constant 0 : index
    %c0_9 = arith.constant 0 : index
    %7 = vector.load %arg5[%c0_8, %c0_9] : memref<2x128xf32, #tpu.memory_space<vmem>>, vector<1x128xf32>
    %8 = vector.broadcast %7 : vector<1x128xf32> to vector<8x128xf32>
    %9 = arith.addf %6, %8 : vector<8x128xf32>
    %10 = arith.negf %9 : vector<8x128xf32>
    %11 = math.exp %10 : vector<8x128xf32>
    %cst_10 = arith.constant 1.000000e+00 : f32
    %12 = vector.broadcast %cst_10 : f32 to vector<8x128xf32>
    %13 = arith.addf %12, %11 : vector<8x128xf32>
    %14 = arith.divf %12, %13 : vector<8x128xf32>
    %c1 = arith.constant 1 : index
    %c0_11 = arith.constant 0 : index
    %15 = vector.load %arg5[%c1, %c0_11] : memref<2x128xf32, #tpu.memory_space<vmem>>, vector<1x128xf32>
    %cst_12 = arith.constant dense<0.000000e+00> : vector<1x8xf32>
    %16 = tpu.matmul %15, %14, %cst_12 {dimension_numbers = #tpu.dot_dimension_numbers<[1], [1], [0], [0], [0, 0, 1, 0], [], []>} : vector<1x128xf32>, vector<8x128xf32>, vector<1x8xf32> -> vector<1x8xf32>
    %c0_13 = arith.constant 0 : index
    %c0_14 = arith.constant 0 : index
    %17 = memref.load %arg6[%c0_13, %c0_14] : memref<1x1xf32, #tpu.memory_space<smem>>
    %18 = vector.broadcast %17 : f32 to vector<1x8xf32>
    %19 = arith.addf %16, %18 : vector<1x8xf32>
    %c0_15 = arith.constant 0 : index
    %c0_16 = arith.constant 0 : index
    %20 = vector.load %arg7[%c0_15, %c0_16] : memref<1x8xf32, #tpu.memory_space<vmem>>, vector<1x8xf32>
    tpu.vector_store %arg7[%c0_15, %c0_16], %19 {strides = array<i32>} : memref<1x8xf32, #tpu.memory_space<vmem>>, vector<1x8xf32>,
    return
  }
  func.func @transform_0(%arg0: i32) -> (i32, i32) {
    %c0_i32 = arith.constant 0 : i32
    %c0_i32_0 = arith.constant 0 : i32
    return %arg0, %c0_i32 : i32, i32
  }
  func.func @transform_1(%arg0: i32) -> (i32, i32) {
    %c0_i32 = arith.constant 0 : i32
    %c0_i32_0 = arith.constant 0 : i32
    return %arg0, %c0_i32 : i32, i32
  }
  func.func @transform_2(%arg0: i32) -> (i32, i32) {
    %c0_i32 = arith.constant 0 : i32
    %c0_i32_0 = arith.constant 0 : i32
    %c0_i32_1 = arith.constant 0 : i32
    return %c0_i32, %c0_i32_0 : i32, i32
  }
  func.func @transform_3(%arg0: i32) -> (i32, i32) {
    %c0_i32 = arith.constant 0 : i32
    %c0_i32_0 = arith.constant 0 : i32
    %c0_i32_1 = arith.constant 0 : i32
    return %c0_i32, %c0_i32_0 : i32, i32
  }
  func.func @transform_4(%arg0: i32) -> (i32, i32) {
    %c0_i32 = arith.constant 0 : i32
    %c0_i32_0 = arith.constant 0 : i32
    %c0_i32_1 = arith.constant 0 : i32
    return %c0_i32, %c0_i32_0 : i32, i32
  }
  func.func @transform_5(%arg0: i32) -> (i32, i32) {
    %c0_i32 = arith.constant 0 : i32
    %c0_i32_0 = arith.constant 0 : i32
    %c0_i32_1 = arith.constant 0 : i32
    return %c0_i32, %c0_i32_0 : i32, i32
  }
  func.func @transform_6(%arg0: i32) -> (i32, i32) {
    %c0_i32 = arith.constant 0 : i32
    %c0_i32_0 = arith.constant 0 : i32
    return %c0_i32, %arg0 : i32, i32
  }
}

</mosaic_0001>

<llo_original>
// kernel: tpu_custom_call.1
$region0: #{tpu_custom_call.1}
  #allocation0 [shape = 'u32[]', space=smem, size = 0x4, offset = 0x4, fixed_abs, tag = 'smem constant byte address 0x4 - core index']
  #allocation1 [shape = 'u32[72,128]{1,0:T(1,128)}', space=vmem, size = 0x9000, scoped, tag = 'internal scratch']
  #allocation2 [shape = 'f32[1,1]{1,0:T(1,128)S(6)}', space=smem, size = 0x200, scoped, tag = 'scoped memory for tpu_custom_call.1']
  %s0 = inlined_call_operand.vmem [shape: f32[8,8], index: 0, kind: input, shape index: {}]
  %s1 = inlined_call_operand.vmem [shape: f32[8,4], index: 1, kind: input, shape index: {}]
  %s2 = inlined_call_operand.hbm [shape: f32[8,128], index: 2, kind: input, shape index: {}]
  %s3 = inlined_call_operand.vmem [shape: f32[4,128], index: 3, kind: input, shape index: {}]
  %s4 = inlined_call_operand.vmem [shape: f32[2,128], index: 4, kind: input, shape index: {}]
  %s5 = inlined_call_operand.<no memory space> [shape: f32[1,1], index: 5, kind: input, shape index: {}]
  %s6 = inlined_call_operand.hbm [shape: f32[1,8], index: 6, kind: output, shape index: {}]
  %s7 = sld [smem:[#allocation0]]
  $region38: #{tpu_custom_call.1} parent=0
    _
  %s9 = ssub.s32 1, %s7
  %s10 = scalar_select 0, %s9, %s7
  %11 = sst [smem:[#allocation2]] %s5
  $region1: #{tpu_custom_call.1} parent=0
    #allocation3 [shape = 'u8[4096]{0}', space=vmem, size = 0x1000, scoped, tag = 'input window, operand 2, single buffered']
    #allocation4 [shape = 's32[1]{0}', space=sflag, size = 0x4, scoped, tag = 'scoped memory for tpu_custom_call.1']
    #allocation5 [shape = 's32[1]{0}', space=sflag, size = 0x4, scoped, tag = 'scoped memory for tpu_custom_call.1']
    #allocation6 [shape = 'u8[512]{0}', space=vmem, size = 0x400, scoped, tag = 'output window, operand 0, single buffered']
    %12 = vsyncpa [#allocation4], 0
    %13 = vsyncpa [#allocation5], 0
    // Predicated region
    $region2: #{tpu_custom_call.1} parent=1 // pred_check
      _
    $region3: #{tpu_custom_call.1} parent=1 // pred_check_branch
      %15 = sbr.rel (0) target = $region5
    $region4: #{tpu_custom_call.1} parent=1 // pred_region
      _
    $region5: #{tpu_custom_call.1} parent=1 // pred_fallthru
      _
    // Predicated region
    $region6: #{tpu_custom_call.1} parent=1 // pred_check
      _
    $region7: #{tpu_custom_call.1} parent=1 // pred_check_branch
      %17 = sbr.rel (0) target = $region9
    $region8: #{tpu_custom_call.1} parent=1 // pred_region
      _
    $region9: #{tpu_custom_call.1} parent=1 // pred_fallthru
      _
    // Predicated region
    $region10: #{tpu_custom_call.1} parent=1 // pred_check
      _
    $region11: #{tpu_custom_call.1} parent=1 // pred_check_branch
      %19 = sbr.rel (0) target = $region13
    $region12: #{tpu_custom_call.1} parent=1 // pred_region
      %21 = vsyncadd [#allocation4], 0
      %s23 = sshll.u32 %s2, 4
      %s24 = int_to_ptr.hbm [resolvable:$true] %s23
      %s25 = sshll.u32 [#allocation3], 4
      %s26 = int_to_ptr.vmem [resolvable:$true] %s25
      %28 = dma.hbm_to_vmem [thread:$0]  %s24, 128, %s26, [#allocation4]
    $region13: #{tpu_custom_call.1} parent=1 // pred_fallthru
      _
    // Predicated region
    $region14: #{tpu_custom_call.1} parent=1 // pred_check
      _
    $region15: #{tpu_custom_call.1} parent=1 // pred_check_branch
      %30 = sbr.rel (0) target = $region17
    $region16: #{tpu_custom_call.1} parent=1 // pred_region
      _
    $region17: #{tpu_custom_call.1} parent=1 // pred_fallthru
      _
    // Predicated region
    $region18: #{tpu_custom_call.1} parent=1 // pred_check
      _
    $region19: #{tpu_custom_call.1} parent=1 // pred_check_branch
      %32 = sbr.rel (0) target = $region21
    $region20: #{tpu_custom_call.1} parent=1 // pred_region
      _
    $region21: #{tpu_custom_call.1} parent=1 // pred_fallthru
      _
    // Predicated region
    $region22: #{tpu_custom_call.1} parent=1 // pred_check
      _
    $region23: #{tpu_custom_call.1} parent=1 // pred_check_branch
      %34 = sbr.rel (0) target = $region25
    $region24: #{tpu_custom_call.1} parent=1 // pred_region
      _
    $region25: #{tpu_custom_call.1} parent=1 // pred_fallthru
      _
    // Predicated region
    $region26: #{tpu_custom_call.1} parent=1 // pred_check
      _
    $region27: #{tpu_custom_call.1} parent=1 // pred_check_branch
      %36 = sbr.rel (0) target = $region29
    $region28: #{tpu_custom_call.1} parent=1 // pred_region
      %38 = dma.done [#allocation4], 128
    $region29: #{tpu_custom_call.1} parent=1 // pred_fallthru
      _
    %v39 = vld [vmem:[%s0] sm:$0xff]
    %v40 = vld [vmem:[#allocation3] sm:$0xff]
    %v41 = vld [vmem:[%s1] sm:$0xff]
    %v42 = vld [vmem:[%s3] sm:$0xf]
    %vm43 = vcmask 31744
    %v45 = vsel %vm43, %v41, 0
    %vm47 = vcmask 1043456
    %v49 = vsel %vm47, %v42, 0
    %51 = vmatpush.msra.mxu0 0.0
    %52 = vmatpush.msra.mxu0 0.0
    %53 = vmatpush.msra.mxu0 0.0
    %54 = vmatpush.msra.mxu0 0.0
    %55 = vmatpush.msra.mxu0 0.0
    %56 = vmatpush.msra.mxu0 0.0
    %57 = vmatpush.msra.mxu0 0.0
    %58 = vmatpush.msra.mxu0 0.0
    %59 = vmatpush.msra.mxu0 0.0
    %60 = vmatpush.msra.mxu0 0.0
    %61 = vmatpush.msra.mxu0 0.0
    %62 = vmatpush.msra.mxu0 0.0
    %63 = vmatpush.msra.mxu0 0.0
    %64 = vmatpush.msra.mxu0 0.0
    %65 = vmatpush.msra.mxu0 0.0
    %66 = vmatpush.msra.mxu0 %v49
    %67 = vmatmul.f32.gmra.mxu0 %v45
    %v68 = vpop.f32.mrf.mxu0
    %v69 = vadd.f32 0.0, %v68
    %70 = vdwg.mxu0
    %vm71 = vcmask 64512
    %v73 = vsel %vm71, %v39, 0
    %75 = vmatpush.msra.mxu0 0.0
    %76 = vmatpush.msra.mxu0 0.0
    %77 = vmatpush.msra.mxu0 0.0
    %78 = vmatpush.msra.mxu0 0.0
    %79 = vmatpush.msra.mxu0 0.0
    %80 = vmatpush.msra.mxu0 0.0
    %81 = vmatpush.msra.mxu0 0.0
    %82 = vmatpush.msra.mxu0 0.0
    %83 = vmatpush.msra.mxu0 0.0
    %84 = vmatpush.msra.mxu0 0.0
    %85 = vmatpush.msra.mxu0 0.0
    %86 = vmatpush.msra.mxu0 0.0
    %87 = vmatpush.msra.mxu0 0.0
    %88 = vmatpush.msra.mxu0 0.0
    %89 = vmatpush.msra.mxu0 0.0
    %90 = vmatpush.msra.mxu0 %v40
    %91 = vmatmul.f32.gmra.mxu0 %v73
    %v92 = vpop.f32.mrf.mxu0
    %v93 = vadd.f32 %v69, %v92
    %94 = vdwg.mxu0
    %v95 = vld [vmem:[%s4] sm:$0x1]
    %v96 = vperm.slane %v95, 0
    %v97 = vadd.f32 %v93, %v96
    %v98 = vxor.u32 %v97, 2147483648
    %v99 = vmul.f32 %v98, 1.442695
    %v100 = vpow.pop %v99
    %v101 = vadd.f32 %v100, 1.0
    %v102 = vrcp.pop %v101
    %v103 = vmul.f32 %v101, %v102
    %v104 = vsub.f32 1.0, %v103
    %v105 = vmul.f32 %v102, %v104
    %v106 = vadd.f32 %v102, %v105
    %vm107 = vweird.f32 %v101
    %vm108 = vweird.f32 %v102
    %vm109 = vmor %vm107, %vm108
    %v110 = vsel %vm109, %v102, %v106
    %v111 = vand.u32 2147483647, %v101
    %vm112 = vcmp.eq.f32.partialorder %v111, 8.507059e+37
    %v113 = vand.u32 %v101, 2147483648
    %v114 = vor.u32 1.1754944e-38, %v113
    %v115 = vsel %vm112, %v114, %v110
    %v116 = vmul.f32 1.0, %v115
    %v117 = vld [vmem:[%s4 + $0x1] sm:$0x1]
    %s118 = sld [smem:[#allocation2]]
    %v119 = vstv %s118
    %120 = vmatpush.xpose.msra.mxu0 0.0
    %121 = vmatpush.xpose.msra.mxu0 0.0
    %122 = vmatpush.xpose.msra.mxu0 0.0
    %123 = vmatpush.xpose.msra.mxu0 0.0
    %124 = vmatpush.xpose.msra.mxu0 0.0
    %125 = vmatpush.xpose.msra.mxu0 0.0
    %126 = vmatpush.xpose.msra.mxu0 0.0
    %127 = vmatpush.xpose.msra.mxu0 0.0
    %128 = vmatpush.xpose.msra.mxu0 0.0
    %129 = vmatpush.xpose.msra.mxu0 0.0
    %130 = vmatpush.xpose.msra.mxu0 0.0
    %131 = vmatpush.xpose.msra.mxu0 0.0
    %132 = vmatpush.xpose.msra.mxu0 0.0
    %133 = vmatpush.xpose.msra.mxu0 0.0
    %134 = vmatpush.xpose.msra.mxu0 0.0
    %135 = vmatpush.xpose.msra.mxu0 %v116
    %136 = vmatmul.f32.gmra.mxu0 %v117
    %v137 = vpop.f32.mrf.mxu0
    %v138 = vadd.f32 %v119, %v137
    %139 = vdwg.mxu0
    %vm140 = vcmask 57344
    %141 = vst.msk [vmem:[#allocation6] sm:$0x1] %vm140, %v138
    // Predicated region
    $region30: #{tpu_custom_call.1} parent=1 // pred_check
      _
    $region31: #{tpu_custom_call.1} parent=1 // pred_check_branch
      %143 = sbr.rel (0) target = $region33
    $region32: #{tpu_custom_call.1} parent=1 // pred_region
      %145 = vsyncadd [#allocation5], 0
      %s147 = sshll.u32 [#allocation6], 4
      %s148 = int_to_ptr.vmem [resolvable:$true] %s147
      %s149 = sshll.u32 %s6, 4
      %s150 = int_to_ptr.hbm [resolvable:$true] %s149
      %152 = dma.vmem_to_hbm [thread:$0]  %s148, 16, %s150, [#allocation5]
    $region33: #{tpu_custom_call.1} parent=1 // pred_fallthru
      _
    // Predicated region
    $region34: #{tpu_custom_call.1} parent=1 // pred_check
      _
    $region35: #{tpu_custom_call.1} parent=1 // pred_check_branch
      %154 = sbr.rel (0) target = $region37
    $region36: #{tpu_custom_call.1} parent=1 // pred_region
      %156 = dma.done [#allocation5], 16
    $region37: #{tpu_custom_call.1} parent=1 // pred_fallthru
      _
    %157 = vsyncpa [#allocation4], 1
    %158 = vsyncpa [#allocation5], 1

</llo_original>
